<compile_context>
chip_gen: v7x
topology: tpu7x:2x2x1
jax: 0.10.0
libtpu: 0.0.40
codegen_flags: <defaults>
</compile_context>

<pallas_src>
import functools

import jax
import jax.numpy as jnp
from jax import lax
from jax.experimental import pallas as pl
from jax.experimental.pallas import tpu as pltpu


def _round_up(v, m):
    return (v + m - 1) // m * m


def _tensorcores_per_chip():
    # Only v7x has 2 TensorCores per chip; splitting the grid for megacore on
    # v5e/v6e just doubles the ~0.35us per-step overhead for small workloads.
    try:
        kind = jax.devices()[0].device_kind.lower()
    except Exception:
        return 1
    return 2 if "v7" in kind else 1


def _choose_tile(bn, max_tile, num_tc):
    tile = min(max_tile, _round_up(bn, 8))
    if num_tc > 1 and bn > 8:
        steps = _round_up(bn, tile) // tile
        if steps < num_tc:
            # Keep >= num_tc grid steps so both v7x TensorCores get work.
            tile = max(8, _round_up(pl.cdiv(bn, num_tc), 8))
    return tile


# -----------------------------------------------------------------------------
# Fused kernel: sentence CNN + position-embedding gather (proj pre-folded)
#               + Sum-merge + LayerNorm
# -----------------------------------------------------------------------------
def node_embedding_kernel(x_ref, box_ref, wcat_ref, wp_ref, ptab_ref, vecs_ref,
                          o_ref, *, k, eps):
    tile, seq_len, c = x_ref.shape
    l_out = seq_len - k + 1                       # 'valid' conv (padding=0)
    rows = tile * seq_len

    conv_b = vecs_ref[0:1, :]                     # packed (8, C) bias/LN block
    proj_b = vecs_ref[1:2, :]
    pos_b = vecs_ref[2:3, :]
    gamma = vecs_ref[3:4, :]
    beta = vecs_ref[4:5, :]

    # ---- SentenceEmbeddingCNN -----------------------------------------------
    # Conv1d as one wide matmul over the aligned (tile*L, C) bf16 view; the K
    # taps' weights are pre-concatenated along the output (lane) axis, so each
    # tap is a lane-aligned chunk of the result that only needs a sublane roll
    # (XLU) to line up with tap 0.  bf16 MXU operands, f32 accumulation.
    x2 = x_ref[...].reshape(rows, c)                                    # bf16
    y = jnp.dot(x2, wcat_ref[...], preferred_element_type=jnp.float32)  # (rows, K*C)
    conv = y[:, :c]
    for j in range(1, k):                         # static unroll, k small
        chunk = y[:, j * c:(j + 1) * c]           # lane-aligned slice
        conv = conv + pltpu.roll(chunk, shift=rows - j, axis=0)
    conv = jnp.maximum(conv + conv_b, 0.0)        # bias + ReLU  (output >= 0)

    # Rows with l >= l_out hold conv-tail / cross-node wrapped garbage: mask to
    # 0 before the per-node max over length.  The 0-fill is correct ONLY
    # because the ReLU above guarantees valid values are >= 0.
    conv3 = conv.reshape(tile, seq_len, c)
    valid = lax.broadcasted_iota(jnp.int32, (tile, seq_len, c), 1) < l_out
    pooled = jnp.max(jnp.where(valid, conv3, 0.0), axis=1)             # (tile, C)

    x_sent = jnp.dot(pooled.astype(jnp.bfloat16), wp_ref[...],
                     preferred_element_type=jnp.float32)
    x_sent = jnp.maximum(x_sent + proj_b, 0.0)    # sentence_input_proj + ReLU

    # ---- PositionEmbedding2D ------------------------------------------------
    # Table gathers as a one-hot-count matmul against the fused, pre-projected
    # table ptab_proj = [x_table; y_table] @ pos_proj_w.  Counts are small
    # exact integers (0..4) -> lossless in bf16; duplicate indices contribute
    # count * row naturally.
    n_tab = ptab_ref.shape[0]
    idx = box_ref[...]                                          # (tile, 4) int32
    tab_iota = lax.broadcasted_iota(jnp.int32, (tile, n_tab), 1)
    counts = ((tab_iota == idx[:, 0:1]).astype(jnp.float32)
              + (tab_iota == idx[:, 1:2]).astype(jnp.float32)
              + (tab_iota == idx[:, 2:3]).astype(jnp.float32)
              + (tab_iota == idx[:, 3:4]).astype(jnp.float32))
    pos = jnp.dot(counts.astype(jnp.bfloat16), ptab_ref[...],
                  preferred_element_type=jnp.float32)
    pos = jnp.maximum(pos + pos_b, 0.0)                         # pos_input_proj + ReLU

    # ---- Sum-merge + LayerNorm (two-pass variance) --------------------------
    yv = x_sent + pos
    mean = jnp.mean(yv, axis=-1, keepdims=True)
    d = yv - mean
    var = jnp.mean(d * d, axis=-1, keepdims=True)
    o_ref[...] = d * lax.rsqrt(var + eps) * gamma + beta
    # TODO(synk): nn.Dropout is an eval-mode identity here; training-mode
    # dropout would use pltpu.prng_seed / pltpu.prng_random_bits.


# -----------------------------------------------------------------------------
# NodeEmbedding forward (wrapper: padding, weight prep, one pallas_call)
# -----------------------------------------------------------------------------
def node_embedding_forward(recog_hidden, gt_bboxes, params, *, eps=1e-5,
                           max_tile=256):
    """recog_hidden: (B, N, L, C), gt_bboxes: (B, N, 4) int32 -> (B, N, C) f32."""
    b, n, seq_len, c = recog_hidden.shape
    bn = b * n
    k = params["conv_w"].shape[0]
    max_pos = params["x_table"].shape[0]
    assert seq_len >= k, "Conv1d(padding=0) requires seq_len >= kernel size"

    num_tc = _tensorcores_per_chip()
    tile = _choose_tile(bn, max_tile, num_tc)
    bn_pad = _round_up(bn, tile)
    grid = (bn_pad // tile,)

    # Flatten + pad the node axis to a tile multiple (padded rows are dropped).
    # Streamed as bf16: halves the dominant HBM read; the kernel's MXU operand
    # was bf16 anyway, so numerics are unchanged.
    x_flat = recog_hidden.reshape(bn, seq_len, c).astype(jnp.bfloat16)
    if bn_pad != bn:
        x_flat = jnp.pad(x_flat, ((0, bn_pad - bn), (0, 0), (0, 0)))

    # Boxes: clamp (note: PyTorch nn.Embedding would raise on out-of-range
    # indices; we clamp) and offset y-coords into the 2nd half of the fused
    # position table [x_table; y_table].
    boxes = jnp.clip(gt_bboxes.reshape(bn, 4), 0, max_pos - 1).astype(jnp.int32)
    boxes = boxes + jnp.array([0, max_pos, 0, max_pos], jnp.int32)
    if bn_pad != bn:
        boxes = jnp.pad(boxes, ((0, bn_pad - bn), (0, 0)))

    # Weight prep (bf16 for MXU operands).  Conv taps concatenated along the
    # output/lane axis: (C_in, K*C_out).
    w_cat = (jnp.transpose(params["conv_w"], (1, 0, 2))
             .reshape(c, k * c).astype(jnp.bfloat16))
    proj_w = params["proj_w"].astype(jnp.bfloat16)
    # Fold pos_input_proj into the table: counts @ (T @ W) == (counts @ T) @ W.
    ptab_proj = jnp.dot(
        jnp.concatenate([params["x_table"], params["y_table"]], axis=0),
        params["pos_proj_w"], precision=lax.Precision.HIGHEST
    ).astype(jnp.bfloat16)                                      # (2*max_pos, C)
    # Pack the five (1, C) bias / LayerNorm vectors into one (8, C) operand.
    vecs = jnp.concatenate(
        [params["conv_b"], params["proj_b"], params["pos_proj_b"],
         params["ln_gamma"], params["ln_beta"],
         jnp.zeros((3, c), jnp.float32)], axis=0)               # (8, C)

    out = pl.pallas_call(
        functools.partial(node_embedding_kernel, k=k, eps=eps),
        out_shape=jax.ShapeDtypeStruct((bn_pad, c), jnp.float32),
        grid_spec=pltpu.PrefetchScalarGridSpec(
            num_scalar_prefetch=0,
            grid=grid,
            in_specs=[
                pl.BlockSpec((tile, seq_len, c), lambda i: (i, 0, 0)),  # x (bf16)
                pl.BlockSpec((tile, 4), lambda i: (i, 0)),              # boxes
                pl.BlockSpec((c, k * c), lambda i: (0, 0)),             # conv W
                pl.BlockSpec((c, c), lambda i: (0, 0)),                 # proj W
                pl.BlockSpec((2 * max_pos, c), lambda i: (0, 0)),       # table@posW
                pl.BlockSpec((8, c), lambda i: (0, 0)),                 # biases/LN
            ],
            out_specs=pl.BlockSpec((tile, c), lambda i: (i, 0)),
        ),
        compiler_params=pltpu.CompilerParams(
            dimension_semantics=("parallel",),
            vmem_limit_bytes=32 * 1024 * 1024),
    )(x_flat, boxes, w_cat, proj_w, ptab_proj, vecs)

    return out[:bn].reshape(b, n, c)


# -----------------------------------------------------------------------------
# Pure-JAX reference (full f32, for a sanity check of the kernel)
# -----------------------------------------------------------------------------
def node_embedding_reference(recog_hidden, gt_bboxes, params, eps=1e-5):
    hp = lax.Precision.HIGHEST
    b, n, seq_len, c = recog_hidden.shape
    x = recog_hidden.reshape(b * n, seq_len, c).astype(jnp.float32)
    k = params["conv_w"].shape[0]
    l_out = seq_len - k + 1
    conv = jnp.zeros((b * n, l_out, c), jnp.float32)
    for j in range(k):
        conv = conv + jnp.einsum("nlc,cd->nld", x[:, j:j + l_out, :],
                                 params["conv_w"][j], precision=hp)
    conv = jnp.maximum(conv + params["conv_b"], 0.0)
    pooled = jnp.max(conv, axis=1)
    xs = jnp.maximum(
        jnp.dot(pooled, params["proj_w"], precision=hp) + params["proj_b"], 0.0)

    p = params["x_table"].shape[0]
    boxes = jnp.clip(gt_bboxes, 0, p - 1).reshape(b * n, 4)
    pos_sum = (params["x_table"][boxes[:, 0]] + params["y_table"][boxes[:, 1]]
               + params["x_table"][boxes[:, 2]] + params["y_table"][boxes[:, 3]])
    pos = jnp.maximum(
        jnp.dot(pos_sum, params["pos_proj_w"], precision=hp)
        + params["pos_proj_b"], 0.0)

    y = xs + pos
    mean = jnp.mean(y, -1, keepdims=True)
    var = jnp.mean((y - mean) ** 2, -1, keepdims=True)
    y = (y - mean) / jnp.sqrt(var + eps)
    y = y * params["ln_gamma"] + params["ln_beta"]
    return y.reshape(b, n, c)


# -----------------------------------------------------------------------------
def init_params(key, c, k, max_pos):
    keys = jax.random.split(key, 8)
    s = 0.05
    return {
        # Conv1d weight stored as (k, C_in, C_out) for the wide-matmul form.
        "conv_w": s * jax.random.normal(keys[0], (k, c, c), jnp.float32),
        "conv_b": s * jax.random.normal(keys[1], (1, c), jnp.float32),
        # sentence_input_proj (stored already transposed: (in, out)).
        "proj_w": s * jax.random.normal(keys[2], (c, c), jnp.float32),
        "proj_b": s * jax.random.normal(keys[3], (1, c), jnp.float32),
        # PositionEmbedding2D tables + projection.
        "x_table": s * jax.random.normal(keys[4], (max_pos, c), jnp.float32),
        "y_table": s * jax.random.normal(keys[5], (max_pos, c), jnp.float32),
        "pos_proj_w": s * jax.random.normal(keys[6], (c, c), jnp.float32),
        "pos_proj_b": s * jax.random.normal(keys[7], (1, c), jnp.float32),
        # LayerNorm affine params (PyTorch default init).
        "ln_gamma": jnp.ones((1, c), jnp.float32),
        "ln_beta": jnp.zeros((1, c), jnp.float32),
    }


if __name__ == "__main__":
    B, N, L, C = 2, 8, 8, 128     # batch, nodes(bboxes), seq length, hidden dim
    K = 3                         # conv kernel size (TRIE: kernel_sizes=[3])
    MAX_POS = 128                 # max_position_embeddings

    key = jax.random.PRNGKey(0)
    k_x, k_box, k_par = jax.random.split(key, 3)

    recog_hidden = jax.random.normal(k_x, (B, N, L, C), jnp.float32)
    gt_bboxes = jax.random.randint(k_box, (B, N, 4), 0, MAX_POS, jnp.int32)
    params = init_params(k_par, C, K, MAX_POS)

    fwd = jax.jit(node_embedding_forward)
    out = jax.block_until_ready(fwd(recog_hidden, gt_bboxes, params))

    ref = node_embedding_reference(recog_hidden, gt_bboxes, params)
    assert out.shape == (B, N, C), out.shape
    # bf16 MXU operands / bf16 input stream (f32 accumulation) vs. full-f32 ref.
    assert jnp.allclose(out, ref, atol=2e-2, rtol=2e-2), (
        float(jnp.max(jnp.abs(out - ref))))

    print("KERNEL_OK")
</pallas_src>

<mosaic_0001>
module attributes {stable_mosaic.version = 11 : i64} {
  func.func @node_embedding_kernel(%arg0: i32, %arg1: memref<16x8x128xbf16, #tpu.memory_space<vmem>>, %arg2: memref<16x4xi32, #tpu.memory_space<vmem>>, %arg3: memref<128x384xbf16, #tpu.memory_space<vmem>>, %arg4: memref<128x128xbf16, #tpu.memory_space<vmem>>, %arg5: memref<256x128xbf16, #tpu.memory_space<vmem>>, %arg6: memref<8x128xf32, #tpu.memory_space<vmem>>, %arg7: memref<16x128xf32, #tpu.memory_space<vmem>>) attributes {dimension_semantics = [#tpu.dimension_semantics<parallel>], iteration_bounds = array<i64: 1>, scalar_prefetch = 0 : i64, scratch_operands = 0 : i64, tpu.core_type = #tpu.core_type<tc>, window_params = [{transform_indices = @transform_0, window_bounds = array<i64: 16, 8, 128>}, {transform_indices = @transform_1, window_bounds = array<i64: 16, 4>}, {pipeline_mode = #tpu.pipeline_mode<synchronous>, transform_indices = @transform_2, window_bounds = array<i64: 128, 384>}, {pipeline_mode = #tpu.pipeline_mode<synchronous>, transform_indices = @transform_3, window_bounds = array<i64: 128, 128>}, {pipeline_mode = #tpu.pipeline_mode<synchronous>, transform_indices = @transform_4, window_bounds = array<i64: 256, 128>}, {pipeline_mode = #tpu.pipeline_mode<synchronous>, transform_indices = @transform_5, window_bounds = array<i64: 8, 128>}, {transform_indices = @transform_6, window_bounds = array<i64: 16, 128>}]} {
    %c0 = arith.constant 0 : index
    %c0_0 = arith.constant 0 : index
    %0 = vector.load %arg6[%c0, %c0_0] : memref<8x128xf32, #tpu.memory_space<vmem>>, vector<1x128xf32>
    %c1 = arith.constant 1 : index
    %c0_1 = arith.constant 0 : index
    %1 = vector.load %arg6[%c1, %c0_1] : memref<8x128xf32, #tpu.memory_space<vmem>>, vector<1x128xf32>
    %c2 = arith.constant 2 : index
    %c0_2 = arith.constant 0 : index
    %2 = vector.load %arg6[%c2, %c0_2] : memref<8x128xf32, #tpu.memory_space<vmem>>, vector<1x128xf32>
    %c3 = arith.constant 3 : index
    %c0_3 = arith.constant 0 : index
    %3 = vector.load %arg6[%c3, %c0_3] : memref<8x128xf32, #tpu.memory_space<vmem>>, vector<1x128xf32>
    %c4 = arith.constant 4 : index
    %c0_4 = arith.constant 0 : index
    %4 = vector.load %arg6[%c4, %c0_4] : memref<8x128xf32, #tpu.memory_space<vmem>>, vector<1x128xf32>
    %c0_5 = arith.constant 0 : index
    %c0_6 = arith.constant 0 : index
    %c0_7 = arith.constant 0 : index
    %5 = vector.load %arg1[%c0_5, %c0_6, %c0_7] : memref<16x8x128xbf16, #tpu.memory_space<vmem>>, vector<16x8x128xbf16>
    %6 = vector.shape_cast %5 : vector<16x8x128xbf16> to vector<128x128xbf16>
    %c0_8 = arith.constant 0 : index
    %c0_9 = arith.constant 0 : index
    %7 = vector.load %arg3[%c0_8, %c0_9] : memref<128x384xbf16, #tpu.memory_space<vmem>>, vector<128x384xbf16>
    %cst = arith.constant dense<0.000000e+00> : vector<128x384xf32>
    %8 = tpu.matmul %6, %7, %cst {dimension_numbers = #tpu.dot_dimension_numbers<[1], [0], [0], [1], [0, 0, 1, 1], [], []>} : vector<128x128xbf16>, vector<128x384xbf16>, vector<128x384xf32> -> vector<128x384xf32>
    %9 = vector.extract_strided_slice %8 {offsets = [0, 0], sizes = [128, 128], strides = [1, 1]} : vector<128x384xf32> to vector<128x128xf32>
    %10 = vector.extract_strided_slice %8 {offsets = [0, 128], sizes = [128, 128], strides = [1, 1]} : vector<128x384xf32> to vector<128x128xf32>
    %c127_i32 = arith.constant 127 : i32
    %11 = tpu.dynamic_rotate %10 by %c127_i32 dim 0 : vector<128x128xf32>, i32 -> vector<128x128xf32>
    %12 = arith.addf %9, %11 : vector<128x128xf32>
    %13 = vector.extract_strided_slice %8 {offsets = [0, 256], sizes = [128, 128], strides = [1, 1]} : vector<128x384xf32> to vector<128x128xf32>
    %c126_i32 = arith.constant 126 : i32
    %14 = tpu.dynamic_rotate %13 by %c126_i32 dim 0 : vector<128x128xf32>, i32 -> vector<128x128xf32>
    %15 = arith.addf %12, %14 : vector<128x128xf32>
    %16 = vector.broadcast %0 : vector<1x128xf32> to vector<128x128xf32>
    %17 = arith.addf %15, %16 : vector<128x128xf32>
    %cst_10 = arith.constant 0.000000e+00 : f32
    %18 = vector.broadcast %cst_10 : f32 to vector<128x128xf32>
    %19 = arith.maximumf %17, %18 : vector<128x128xf32>
    %20 = vector.shape_cast %19 : vector<128x128xf32> to vector<16x8x128xf32>
    %21 = tpu.iota {dimensions = array<i32: 1>} : vector<16x8x128xi32>
    %c6_i32 = arith.constant 6 : i32
    %22 = vector.broadcast %c6_i32 : i32 to vector<16x8x128xi32>
    %23 = arith.cmpi slt, %21, %22 : vector<16x8x128xi32>
    %cst_11 = arith.constant 0.000000e+00 : f32
    %24 = vector.broadcast %cst_11 : f32 to vector<16x8x128xf32>
    %25 = arith.select %23, %20, %24 : vector<16x8x128xi1>, vector<16x8x128xf32>
    %cst_12 = arith.constant dense<0xFF800000> : vector<16x128xf32>
    %26 = vector.multi_reduction <maximumf>, %25, %cst_12 [1] : vector<16x8x128xf32> to vector<16x128xf32>
    %27 = arith.truncf %26 : vector<16x128xf32> to vector<16x128xbf16>
    %c0_13 = arith.constant 0 : index
    %c0_14 = arith.constant 0 : index
    %28 = vector.load %arg4[%c0_13, %c0_14] : memref<128x128xbf16, #tpu.memory_space<vmem>>, vector<128x128xbf16>
    %cst_15 = arith.constant dense<0.000000e+00> : vector<16x128xf32>
    %29 = tpu.matmul %27, %28, %cst_15 {dimension_numbers = #tpu.dot_dimension_numbers<[1], [0], [0], [1], [0, 0, 1, 1], [], []>} : vector<16x128xbf16>, vector<128x128xbf16>, vector<16x128xf32> -> vector<16x128xf32>
    %30 = vector.broadcast %1 : vector<1x128xf32> to vector<16x128xf32>
    %31 = arith.addf %29, %30 : vector<16x128xf32>
    %cst_16 = arith.constant 0.000000e+00 : f32
    %32 = vector.broadcast %cst_16 : f32 to vector<16x128xf32>
    %33 = arith.maximumf %31, %32 : vector<16x128xf32>
    %c0_17 = arith.constant 0 : index
    %c0_18 = arith.constant 0 : index
    %34 = vector.load %arg2[%c0_17, %c0_18] : memref<16x4xi32, #tpu.memory_space<vmem>>, vector<16x4xi32>
    %35 = tpu.iota {dimensions = array<i32: 1>} : vector<16x256xi32>
    %36 = vector.extract_strided_slice %34 {offsets = [0, 0], sizes = [16, 1], strides = [1, 1]} : vector<16x4xi32> to vector<16x1xi32>
    %37 = vector.broadcast %36 : vector<16x1xi32> to vector<16x256xi32>
    %38 = arith.cmpi eq, %35, %37 : vector<16x256xi32>
    %39 = arith.extui %38 : vector<16x256xi1> to vector<16x256xi32>
    %40 = arith.sitofp %39 : vector<16x256xi32> to vector<16x256xf32>
    %41 = vector.extract_strided_slice %34 {offsets = [0, 1], sizes = [16, 1], strides = [1, 1]} : vector<16x4xi32> to vector<16x1xi32>
    %42 = vector.broadcast %41 : vector<16x1xi32> to vector<16x256xi32>
    %43 = arith.cmpi eq, %35, %42 : vector<16x256xi32>
    %44 = arith.extui %43 : vector<16x256xi1> to vector<16x256xi32>
    %45 = arith.sitofp %44 : vector<16x256xi32> to vector<16x256xf32>
    %46 = arith.addf %40, %45 : vector<16x256xf32>
    %47 = vector.extract_strided_slice %34 {offsets = [0, 2], sizes = [16, 1], strides = [1, 1]} : vector<16x4xi32> to vector<16x1xi32>
    %48 = vector.broadcast %47 : vector<16x1xi32> to vector<16x256xi32>
    %49 = arith.cmpi eq, %35, %48 : vector<16x256xi32>
    %50 = arith.extui %49 : vector<16x256xi1> to vector<16x256xi32>
    %51 = arith.sitofp %50 : vector<16x256xi32> to vector<16x256xf32>
    %52 = arith.addf %46, %51 : vector<16x256xf32>
    %53 = vector.extract_strided_slice %34 {offsets = [0, 3], sizes = [16, 1], strides = [1, 1]} : vector<16x4xi32> to vector<16x1xi32>
    %54 = vector.broadcast %53 : vector<16x1xi32> to vector<16x256xi32>
    %55 = arith.cmpi eq, %35, %54 : vector<16x256xi32>
    %56 = arith.extui %55 : vector<16x256xi1> to vector<16x256xi32>
    %57 = arith.sitofp %56 : vector<16x256xi32> to vector<16x256xf32>
    %58 = arith.addf %52, %57 : vector<16x256xf32>
    %59 = arith.truncf %58 : vector<16x256xf32> to vector<16x256xbf16>
    %c0_19 = arith.constant 0 : index
    %c0_20 = arith.constant 0 : index
    %60 = vector.load %arg5[%c0_19, %c0_20] : memref<256x128xbf16, #tpu.memory_space<vmem>>, vector<256x128xbf16>
    %cst_21 = arith.constant dense<0.000000e+00> : vector<16x128xf32>
    %61 = tpu.matmul %59, %60, %cst_21 {dimension_numbers = #tpu.dot_dimension_numbers<[1], [0], [0], [1], [0, 0, 1, 1], [], []>} : vector<16x256xbf16>, vector<256x128xbf16>, vector<16x128xf32> -> vector<16x128xf32>
    %62 = vector.broadcast %2 : vector<1x128xf32> to vector<16x128xf32>
    %63 = arith.addf %61, %62 : vector<16x128xf32>
    %cst_22 = arith.constant 0.000000e+00 : f32
    %64 = vector.broadcast %cst_22 : f32 to vector<16x128xf32>
    %65 = arith.maximumf %63, %64 : vector<16x128xf32>
    %66 = arith.addf %33, %65 : vector<16x128xf32>
    %cst_23 = arith.constant dense<0.000000e+00> : vector<16xf32>
    %67 = vector.multi_reduction <add>, %66, %cst_23 [1] : vector<16x128xf32> to vector<16xf32>
    %68 = vector.shape_cast %67 : vector<16xf32> to vector<16x1xf32>
    %cst_24 = arith.constant 1.280000e+02 : f32
    %69 = vector.broadcast %cst_24 : f32 to vector<16x1xf32>
    %70 = arith.divf %68, %69 : vector<16x1xf32>
    %71 = vector.broadcast %70 : vector<16x1xf32> to vector<16x128xf32>
    %72 = arith.subf %66, %71 : vector<16x128xf32>
    %73 = arith.mulf %72, %72 : vector<16x128xf32>
    %cst_25 = arith.constant dense<0.000000e+00> : vector<16xf32>
    %74 = vector.multi_reduction <add>, %73, %cst_25 [1] : vector<16x128xf32> to vector<16xf32>
    %75 = vector.shape_cast %74 : vector<16xf32> to vector<16x1xf32>
    %cst_26 = arith.constant 1.280000e+02 : f32
    %76 = vector.broadcast %cst_26 : f32 to vector<16x1xf32>
    %77 = arith.divf %75, %76 : vector<16x1xf32>
    %cst_27 = arith.constant 9.99999974E-6 : f32
    %78 = vector.broadcast %cst_27 : f32 to vector<16x1xf32>
    %79 = arith.addf %77, %78 : vector<16x1xf32>
    %80 = math.rsqrt %79 : vector<16x1xf32>
    %81 = vector.broadcast %80 : vector<16x1xf32> to vector<16x128xf32>
    %82 = arith.mulf %72, %81 : vector<16x128xf32>
    %83 = vector.broadcast %3 : vector<1x128xf32> to vector<16x128xf32>
    %84 = arith.mulf %82, %83 : vector<16x128xf32>
    %85 = vector.broadcast %4 : vector<1x128xf32> to vector<16x128xf32>
    %86 = arith.addf %84, %85 : vector<16x128xf32>
    %c0_28 = arith.constant 0 : index
    %c0_29 = arith.constant 0 : index
    %87 = vector.load %arg7[%c0_28, %c0_29] : memref<16x128xf32, #tpu.memory_space<vmem>>, vector<16x128xf32>
    tpu.vector_store %arg7[%c0_28, %c0_29], %86 {strides = array<i32>} : memref<16x128xf32, #tpu.memory_space<vmem>>, vector<16x128xf32>,
    return
  }
  func.func @transform_0(%arg0: i32) -> (i32, i32, i32) {
    %c0_i32 = arith.constant 0 : i32
    %c0_i32_0 = arith.constant 0 : i32
    %c0_i32_1 = arith.constant 0 : i32
    return %arg0, %c0_i32, %c0_i32_0 : i32, i32, i32
  }
  func.func @transform_1(%arg0: i32) -> (i32, i32) {
    %c0_i32 = arith.constant 0 : i32
    %c0_i32_0 = arith.constant 0 : i32
    return %arg0, %c0_i32 : i32, i32
  }
  func.func @transform_2(%arg0: i32) -> (i32, i32) {
    %c0_i32 = arith.constant 0 : i32
    %c0_i32_0 = arith.constant 0 : i32
    %c0_i32_1 = arith.constant 0 : i32
    return %c0_i32, %c0_i32_0 : i32, i32
  }
  func.func @transform_3(%arg0: i32) -> (i32, i32) {
    %c0_i32 = arith.constant 0 : i32
    %c0_i32_0 = arith.constant 0 : i32
    %c0_i32_1 = arith.constant 0 : i32
    return %c0_i32, %c0_i32_0 : i32, i32
  }
  func.func @transform_4(%arg0: i32) -> (i32, i32) {
    %c0_i32 = arith.constant 0 : i32
    %c0_i32_0 = arith.constant 0 : i32
    %c0_i32_1 = arith.constant 0 : i32
    return %c0_i32, %c0_i32_0 : i32, i32
  }
  func.func @transform_5(%arg0: i32) -> (i32, i32) {
    %c0_i32 = arith.constant 0 : i32
    %c0_i32_0 = arith.constant 0 : i32
    %c0_i32_1 = arith.constant 0 : i32
    return %c0_i32, %c0_i32_0 : i32, i32
  }
  func.func @transform_6(%arg0: i32) -> (i32, i32) {
    %c0_i32 = arith.constant 0 : i32
    %c0_i32_0 = arith.constant 0 : i32
    return %arg0, %c0_i32 : i32, i32
  }
}

</mosaic_0001>

<llo_original>
// kernel: node_embedding_forward.1
$region0: #{node_embedding_forward.1}
  #allocation0 [shape = 'u32[]', space=smem, size = 0x4, offset = 0x4, fixed_abs, tag = 'smem constant byte address 0x4 - core index']
  #allocation1 [shape = 'u32[144,128]{1,0:T(1,128)}', space=vmem, size = 0x12000, scoped, tag = 'internal scratch']
  %s0 = inlined_call_operand.vmem [shape: bf16[16,8,128], index: 0, kind: input, shape index: {}]
  %s1 = inlined_call_operand.vmem [shape: s32[16,4], index: 1, kind: input, shape index: {}]
  %s2 = inlined_call_operand.vmem [shape: bf16[128,384], index: 2, kind: input, shape index: {}]
  %s3 = inlined_call_operand.vmem [shape: bf16[128,128], index: 3, kind: input, shape index: {}]
  %s4 = inlined_call_operand.vmem [shape: bf16[256,128], index: 4, kind: input, shape index: {}]
  %s5 = inlined_call_operand.vmem [shape: f32[8,128], index: 5, kind: input, shape index: {}]
  %s6 = inlined_call_operand.hbm [shape: f32[16,128], index: 6, kind: output, shape index: {}]
  %s7 = sld [smem:[#allocation0]]
  $region34: #{node_embedding_forward.1} parent=0
    _
  %s9 = ssub.s32 1, %s7
  %s10 = scalar_select 0, %s9, %s7
  $region1: #{node_embedding_forward.1} parent=0
    #allocation2 [shape = 'u8[8192]{0}', space=vmem, size = 0x2000, scoped, tag = 'output window, operand 0, single buffered']
    #allocation3 [shape = 's32[1]{0}', space=sflag, size = 0x4, scoped, tag = 'scoped memory for node_embedding_forward.1']
    %11 = vsyncpa [#allocation3], 0
    // Predicated region
    $region2: #{node_embedding_forward.1} parent=1 // pred_check
      _
    $region3: #{node_embedding_forward.1} parent=1 // pred_check_branch
      %13 = sbr.rel (0) target = $region5
    $region4: #{node_embedding_forward.1} parent=1 // pred_region
      _
    $region5: #{node_embedding_forward.1} parent=1 // pred_fallthru
      _
    // Predicated region
    $region6: #{node_embedding_forward.1} parent=1 // pred_check
      _
    $region7: #{node_embedding_forward.1} parent=1 // pred_check_branch
      %15 = sbr.rel (0) target = $region9
    $region8: #{node_embedding_forward.1} parent=1 // pred_region
      _
    $region9: #{node_embedding_forward.1} parent=1 // pred_fallthru
      _
    // Predicated region
    $region10: #{node_embedding_forward.1} parent=1 // pred_check
      _
    $region11: #{node_embedding_forward.1} parent=1 // pred_check_branch
      %17 = sbr.rel (0) target = $region13
    $region12: #{node_embedding_forward.1} parent=1 // pred_region
      _
    $region13: #{node_embedding_forward.1} parent=1 // pred_fallthru
      _
    // Predicated region
    $region14: #{node_embedding_forward.1} parent=1 // pred_check
      _
    $region15: #{node_embedding_forward.1} parent=1 // pred_check_branch
      %19 = sbr.rel (0) target = $region17
    $region16: #{node_embedding_forward.1} parent=1 // pred_region
      _
    $region17: #{node_embedding_forward.1} parent=1 // pred_fallthru
      _
    // Predicated region
    $region18: #{node_embedding_forward.1} parent=1 // pred_check
      _
    $region19: #{node_embedding_forward.1} parent=1 // pred_check_branch
      %21 = sbr.rel (0) target = $region21
    $region20: #{node_embedding_forward.1} parent=1 // pred_region
      _
    $region21: #{node_embedding_forward.1} parent=1 // pred_fallthru
      _
    // Predicated region
    $region22: #{node_embedding_forward.1} parent=1 // pred_check
      _
    $region23: #{node_embedding_forward.1} parent=1 // pred_check_branch
      %23 = sbr.rel (0) target = $region25
    $region24: #{node_embedding_forward.1} parent=1 // pred_region
      _
    $region25: #{node_embedding_forward.1} parent=1 // pred_fallthru
      _
    %v25 = vld [vmem:[%s5] sm:$0x1]
    %v26 = vld [vmem:[%s5 + $0x1] sm:$0x1]
    %v27 = vld [vmem:[%s5 + $0x2] sm:$0x1]
    %v28 = vld [vmem:[%s5 + $0x3] sm:$0x1]
    %v29 = vld [vmem:[%s5 + $0x4] sm:$0x1]
    %v30 = vld [vmem:[%s0] sm:$0xf]
    %v31 = vld [vmem:[%s0 + $0x4] sm:$0xf]
    %v32 = vld [vmem:[%s0 + $0x8] sm:$0xf]
    %v33 = vld [vmem:[%s0 + $0xc] sm:$0xf]
    %v34 = vld [vmem:[%s0 + $0x10] sm:$0xf]
    %v35 = vld [vmem:[%s0 + $0x14] sm:$0xf]
    %v36 = vld [vmem:[%s0 + $0x18] sm:$0xf]
    %v37 = vld [vmem:[%s0 + $0x1c] sm:$0xf]
    %v38 = vld [vmem:[%s0 + $0x20] sm:$0xf]
    %v39 = vld [vmem:[%s0 + $0x24] sm:$0xf]
    %v40 = vld [vmem:[%s0 + $0x28] sm:$0xf]
    %v41 = vld [vmem:[%s0 + $0x2c] sm:$0xf]
    %v42 = vld [vmem:[%s0 + $0x30] sm:$0xf]
    %v43 = vld [vmem:[%s0 + $0x34] sm:$0xf]
    %v44 = vld [vmem:[%s0 + $0x38] sm:$0xf]
    %v45 = vld [vmem:[%s0 + $0x3c] sm:$0xf]
    %v46 = vld [vmem:[%s2] sm:$0xff]
    %v47 = vld [vmem:[%s2 + $0x8] sm:$0xf]
    %v48 = vld [vmem:[%s2 + $0xc] sm:$0xff]
    %v49 = vld [vmem:[%s2 + $0x14] sm:$0xf]
    %v50 = vld [vmem:[%s2 + $0x18] sm:$0xff]
    %v51 = vld [vmem:[%s2 + $0x20] sm:$0xf]
    %v52 = vld [vmem:[%s2 + $0x24] sm:$0xff]
    %v53 = vld [vmem:[%s2 + $0x2c] sm:$0xf]
    %v54 = vld [vmem:[%s2 + $0x30] sm:$0xff]
    %v55 = vld [vmem:[%s2 + $0x38] sm:$0xf]
    %v56 = vld [vmem:[%s2 + $0x3c] sm:$0xff]
    %v57 = vld [vmem:[%s2 + $0x44] sm:$0xf]
    %v58 = vld [vmem:[%s2 + $0x48] sm:$0xff]
    %v59 = vld [vmem:[%s2 + $0x50] sm:$0xf]
    %v60 = vld [vmem:[%s2 + $0x54] sm:$0xff]
    %v61 = vld [vmem:[%s2 + $0x5c] sm:$0xf]
    %v62 = vld [vmem:[%s2 + $0x60] sm:$0xff]
    %v63 = vld [vmem:[%s2 + $0x68] sm:$0xf]
    %v64 = vld [vmem:[%s2 + $0x6c] sm:$0xff]
    %v65 = vld [vmem:[%s2 + $0x74] sm:$0xf]
    %v66 = vld [vmem:[%s2 + $0x78] sm:$0xff]
    %v67 = vld [vmem:[%s2 + $0x80] sm:$0xf]
    %v68 = vld [vmem:[%s2 + $0x84] sm:$0xff]
    %v69 = vld [vmem:[%s2 + $0x8c] sm:$0xf]
    %v70 = vld [vmem:[%s2 + $0x90] sm:$0xff]
    %v71 = vld [vmem:[%s2 + $0x98] sm:$0xf]
    %v72 = vld [vmem:[%s2 + $0x9c] sm:$0xff]
    %v73 = vld [vmem:[%s2 + $0xa4] sm:$0xf]
    %v74 = vld [vmem:[%s2 + $0xa8] sm:$0xff]
    %v75 = vld [vmem:[%s2 + $0xb0] sm:$0xf]
    %v76 = vld [vmem:[%s2 + $0xb4] sm:$0xff]
    %v77 = vld [vmem:[%s2 + $0xbc] sm:$0xf]
    %v94 = vunpack.c.l.b16 %v30
    %v95 = vunpack.c.l.b16 %v31
    %v96 = vunpack.c.l.b16 %v32
    %v97 = vunpack.c.l.b16 %v33
    %v98 = vunpack.c.l.b16 %v34
    %v99 = vunpack.c.l.b16 %v35
    %v100 = vunpack.c.l.b16 %v36
    %v101 = vunpack.c.l.b16 %v37
    %v102 = vunpack.c.l.b16 %v38
    %v103 = vunpack.c.l.b16 %v39
    %v104 = vunpack.c.l.b16 %v40
    %v105 = vunpack.c.l.b16 %v41
    %v106 = vunpack.c.l.b16 %v42
    %v107 = vunpack.c.l.b16 %v43
    %v108 = vunpack.c.l.b16 %v44
    %v109 = vunpack.c.l.b16 %v45
    %v110 = vpack.c.b16 %v95, %v94
    %v111 = vpack.c.b16 %v97, %v96
    %v112 = vpack.c.b16 %v99, %v98
    %v113 = vpack.c.b16 %v101, %v100
    %v114 = vpack.c.b16 %v103, %v102
    %v115 = vpack.c.b16 %v105, %v104
    %v116 = vpack.c.b16 %v107, %v106
    %v117 = vpack.c.b16 %v109, %v108
    %v158 = vunpack.c.l.b16 %v46
    %v159 = vunpack.c.h.b16 %v46
    %v160 = vunpack.c.l.b16 %v47
    %v161 = vunpack.c.l.b16 %v48
    %v162 = vunpack.c.h.b16 %v48
    %v163 = vunpack.c.l.b16 %v49
    %v164 = vunpack.c.l.b16 %v50
    %v165 = vunpack.c.h.b16 %v50
    %v166 = vunpack.c.l.b16 %v51
    %v167 = vunpack.c.l.b16 %v52
    %v168 = vunpack.c.h.b16 %v52
    %v169 = vunpack.c.l.b16 %v53
    %v170 = vunpack.c.l.b16 %v54
    %v171 = vunpack.c.h.b16 %v54
    %v172 = vunpack.c.l.b16 %v55
    %v173 = vunpack.c.l.b16 %v56
    %v174 = vunpack.c.h.b16 %v56
    %v175 = vunpack.c.l.b16 %v57
    %v176 = vunpack.c.l.b16 %v58
    %v177 = vunpack.c.h.b16 %v58
    %v178 = vunpack.c.l.b16 %v59
    %v179 = vunpack.c.l.b16 %v60
    %v180 = vunpack.c.h.b16 %v60
    %v181 = vunpack.c.l.b16 %v61
    %v182 = vunpack.c.l.b16 %v62
    %v183 = vunpack.c.h.b16 %v62
    %v184 = vunpack.c.l.b16 %v63
    %v185 = vunpack.c.l.b16 %v64
    %v186 = vunpack.c.h.b16 %v64
    %v187 = vunpack.c.l.b16 %v65
    %v188 = vunpack.c.l.b16 %v66
    %v189 = vunpack.c.h.b16 %v66
    %v190 = vunpack.c.l.b16 %v67
    %v191 = vunpack.c.l.b16 %v68
    %v192 = vunpack.c.h.b16 %v68
    %v193 = vunpack.c.l.b16 %v69
    %v194 = vunpack.c.l.b16 %v70
    %v195 = vunpack.c.h.b16 %v70
    %v196 = vunpack.c.l.b16 %v71
    %v197 = vunpack.c.l.b16 %v72
    %v198 = vunpack.c.h.b16 %v72
    %v199 = vunpack.c.l.b16 %v73
    %v200 = vunpack.c.l.b16 %v74
    %v201 = vunpack.c.h.b16 %v74
    %v202 = vunpack.c.l.b16 %v75
    %v203 = vunpack.c.l.b16 %v76
    %v204 = vunpack.c.h.b16 %v76
    %v205 = vunpack.c.l.b16 %v77
    %v206 = vpack.c.b16 %v161, %v158
    %v207 = vpack.c.b16 %v162, %v159
    %v208 = vpack.c.b16 %v163, %v160
    %v209 = vpack.c.b16 %v167, %v164
    %v210 = vpack.c.b16 %v168, %v165
    %v211 = vpack.c.b16 %v169, %v166
    %v212 = vpack.c.b16 %v173, %v170
    %v213 = vpack.c.b16 %v174, %v171
    %v214 = vpack.c.b16 %v175, %v172
    %v215 = vpack.c.b16 %v179, %v176
    %v216 = vpack.c.b16 %v180, %v177
    %v217 = vpack.c.b16 %v181, %v178
    %v218 = vpack.c.b16 %v185, %v182
    %v219 = vpack.c.b16 %v186, %v183
    %v220 = vpack.c.b16 %v187, %v184
    %v221 = vpack.c.b16 %v191, %v188
    %v222 = vpack.c.b16 %v192, %v189
    %v223 = vpack.c.b16 %v193, %v190
    %v224 = vpack.c.b16 %v197, %v194
    %v225 = vpack.c.b16 %v198, %v195
    %v226 = vpack.c.b16 %v199, %v196
    %v227 = vpack.c.b16 %v203, %v200
    %v228 = vpack.c.b16 %v204, %v201
    %v229 = vpack.c.b16 %v205, %v202
    %254 = vmatprep.subr.bf16.mxu0 %v207
    %255 = vmatpush1.bf16.msra.mxu0 %v206
    %256 = vmatprep.subr.bf16.mxu0 %v210
    %257 = vmatpush1.bf16.msra.mxu0 %v209
    %258 = vmatprep.subr.bf16.mxu0 %v213
    %259 = vmatpush1.bf16.msra.mxu0 %v212
    %260 = vmatprep.subr.bf16.mxu0 %v216
    %261 = vmatpush1.bf16.msra.mxu0 %v215
    %262 = vmatprep.subr.bf16.mxu0 %v219
    %263 = vmatpush1.bf16.msra.mxu0 %v218
    %264 = vmatprep.subr.bf16.mxu0 %v222
    %265 = vmatpush1.bf16.msra.mxu0 %v221
    %266 = vmatprep.subr.bf16.mxu0 %v225
    %267 = vmatpush1.bf16.msra.mxu0 %v224
    %268 = vmatprep.subr.bf16.mxu0 %v228
    %269 = vmatpush1.bf16.msra.mxu0 %v227
    %270 = vmatprep.subr.bf16.mxu0 0
    %271 = vmatpush1.bf16.msra.mxu0 0
    %272 = vmatprep.subr.bf16.mxu0 0
    %273 = vmatpush1.bf16.msra.mxu0 0
    %274 = vmatprep.subr.bf16.mxu0 0
    %275 = vmatpush1.bf16.msra.mxu0 0
    %276 = vmatprep.subr.bf16.mxu0 0
    %277 = vmatpush1.bf16.msra.mxu0 0
    %278 = vmatprep.subr.bf16.mxu0 0
    %279 = vmatpush1.bf16.msra.mxu0 0
    %280 = vmatprep.subr.bf16.mxu0 0
    %281 = vmatpush1.bf16.msra.mxu0 0
    %282 = vmatprep.subr.bf16.mxu0 0
    %283 = vmatpush1.bf16.msra.mxu0 0
    %284 = vmatprep.subr.bf16.mxu0 0
    %285 = vmatpush1.bf16.msra.mxu0 0
    %286 = vmatprep.mubr.bf16.mxu0 0
    %287 = vmatmul.mubr.bf16.gmra.mrb[0].mxu0 %v110
    %v288 = vpop.f32.mrb[0].mxu0
    %v289 = vadd.f32 0.0, %v288
    %v290 = vpop.f32.mrb[0].mxu0
    %v291 = vadd.f32 0.0, %v290
    %v292 = vpop.f32.mrb[0].mxu0
    %v293 = vadd.f32 0.0, %v292
    %v294 = vpop.f32.mrb[0].mxu0
    %v295 = vadd.f32 0.0, %v294
    %296 = vmatprep.mubr.bf16.mxu0 0
    %297 = vmatmul.mubr.bf16.gmra.mrb[0].mxu0 %v111
    %v298 = vpop.f32.mrb[0].mxu0
    %v299 = vadd.f32 0.0, %v298
    %v300 = vpop.f32.mrb[0].mxu0
    %v301 = vadd.f32 0.0, %v300
    %v302 = vpop.f32.mrb[0].mxu0
    %v303 = vadd.f32 0.0, %v302
    %v304 = vpop.f32.mrb[0].mxu0
    %v305 = vadd.f32 0.0, %v304
    %306 = vmatprep.mubr.bf16.mxu0 0
    %307 = vmatmul.mubr.bf16.gmra.mrb[0].mxu0 %v112
    %v308 = vpop.f32.mrb[0].mxu0
    %v309 = vadd.f32 0.0, %v308
    %v310 = vpop.f32.mrb[0].mxu0
    %v311 = vadd.f32 0.0, %v310
    %v312 = vpop.f32.mrb[0].mxu0
    %v313 = vadd.f32 0.0, %v312
    %v314 = vpop.f32.mrb[0].mxu0
    %v315 = vadd.f32 0.0, %v314
    %316 = vmatprep.mubr.bf16.mxu0 0
    %317 = vmatmul.mubr.bf16.gmra.mrb[0].mxu0 %v113
    %v318 = vpop.f32.mrb[0].mxu0
    %v319 = vadd.f32 0.0, %v318
    %v320 = vpop.f32.mrb[0].mxu0
    %v321 = vadd.f32 0.0, %v320
    %v322 = vpop.f32.mrb[0].mxu0
    %v323 = vadd.f32 0.0, %v322
    %v324 = vpop.f32.mrb[0].mxu0
    %v325 = vadd.f32 0.0, %v324
    %326 = vmatprep.mubr.bf16.mxu0 0
    %327 = vmatmul.mubr.bf16.gmra.mrb[0].mxu0 %v114
    %v328 = vpop.f32.mrb[0].mxu0
    %v329 = vadd.f32 0.0, %v328
    %v330 = vpop.f32.mrb[0].mxu0
    %v331 = vadd.f32 0.0, %v330
    %v332 = vpop.f32.mrb[0].mxu0
    %v333 = vadd.f32 0.0, %v332
    %v334 = vpop.f32.mrb[0].mxu0
    %v335 = vadd.f32 0.0, %v334
    %336 = vmatprep.mubr.bf16.mxu0 0
    %337 = vmatmul.mubr.bf16.gmra.mrb[0].mxu0 %v115
    %v338 = vpop.f32.mrb[0].mxu0
    %v339 = vadd.f32 0.0, %v338
    %v340 = vpop.f32.mrb[0].mxu0
    %v341 = vadd.f32 0.0, %v340
    %v342 = vpop.f32.mrb[0].mxu0
    %v343 = vadd.f32 0.0, %v342
    %v344 = vpop.f32.mrb[0].mxu0
    %v345 = vadd.f32 0.0, %v344
    %346 = vmatprep.mubr.bf16.mxu0 0
    %347 = vmatmul.mubr.bf16.gmra.mrb[0].mxu0 %v116
    %v348 = vpop.f32.mrb[0].mxu0
    %v349 = vadd.f32 0.0, %v348
    %v350 = vpop.f32.mrb[0].mxu0
    %v351 = vadd.f32 0.0, %v350
    %v352 = vpop.f32.mrb[0].mxu0
    %v353 = vadd.f32 0.0, %v352
    %v354 = vpop.f32.mrb[0].mxu0
    %v355 = vadd.f32 0.0, %v354
    %356 = vmatprep.mubr.bf16.mxu0 0
    %357 = vmatmul.mubr.bf16.gmra.mrb[0].mxu0 %v117
    %v358 = vpop.f32.mrb[0].mxu0
    %v359 = vadd.f32 0.0, %v358
    %v360 = vpop.f32.mrb[0].mxu0
    %v361 = vadd.f32 0.0, %v360
    %v362 = vpop.f32.mrb[0].mxu0
    %v363 = vadd.f32 0.0, %v362
    %v364 = vpop.f32.mrb[0].mxu0
    %v365 = vadd.f32 0.0, %v364
    %366 = vdwg.mxu0
    %367 = vmatprep.subr.bf16.mxu0 0
    %368 = vmatpush1.bf16.msra.mxu0 %v208
    %369 = vmatprep.subr.bf16.mxu0 0
    %370 = vmatpush1.bf16.msra.mxu0 %v211
    %371 = vmatprep.subr.bf16.mxu0 0
    %372 = vmatpush1.bf16.msra.mxu0 %v214
    %373 = vmatprep.subr.bf16.mxu0 0
    %374 = vmatpush1.bf16.msra.mxu0 %v217
    %375 = vmatprep.subr.bf16.mxu0 0
    %376 = vmatpush1.bf16.msra.mxu0 %v220
    %377 = vmatprep.subr.bf16.mxu0 0
    %378 = vmatpush1.bf16.msra.mxu0 %v223
    %379 = vmatprep.subr.bf16.mxu0 0
    %380 = vmatpush1.bf16.msra.mxu0 %v226
    %381 = vmatprep.subr.bf16.mxu0 0
    %382 = vmatpush1.bf16.msra.mxu0 %v229
    %383 = vmatprep.subr.bf16.mxu0 0
    %384 = vmatpush1.bf16.msra.mxu0 0
    %385 = vmatprep.subr.bf16.mxu0 0
    %386 = vmatpush1.bf16.msra.mxu0 0
    %387 = vmatprep.subr.bf16.mxu0 0
    %388 = vmatpush1.bf16.msra.mxu0 0
    %389 = vmatprep.subr.bf16.mxu0 0
    %390 = vmatpush1.bf16.msra.mxu0 0
    %391 = vmatprep.subr.bf16.mxu0 0
    %392 = vmatpush1.bf16.msra.mxu0 0
    %393 = vmatprep.subr.bf16.mxu0 0
    %394 = vmatpush1.bf16.msra.mxu0 0
    %395 = vmatprep.subr.bf16.mxu0 0
    %396 = vmatpush1.bf16.msra.mxu0 0
    %397 = vmatprep.subr.bf16.mxu0 0
    %398 = vmatpush1.bf16.msra.mxu0 0
    %399 = vmatprep.mubr.bf16.mxu0 0
    %400 = vmatmul.mubr.bf16.gmra.mrb[0].mxu0 %v110
    %v401 = vpop.f32.mrb[0].mxu0
    %v402 = vadd.f32 0.0, %v401
    %v403 = vpop.f32.mrb[0].mxu0
    %v404 = vpop.f32.mrb[0].mxu0
    %v405 = vadd.f32 0.0, %v404
    %v406 = vpop.f32.mrb[0].mxu0
    %407 = vmatprep.mubr.bf16.mxu0 0
    %408 = vmatmul.mubr.bf16.gmra.mrb[0].mxu0 %v111
    %v409 = vpop.f32.mrb[0].mxu0
    %v410 = vadd.f32 0.0, %v409
    %v411 = vpop.f32.mrb[0].mxu0
    %v412 = vpop.f32.mrb[0].mxu0
    %v413 = vadd.f32 0.0, %v412
    %v414 = vpop.f32.mrb[0].mxu0
    %415 = vmatprep.mubr.bf16.mxu0 0
    %416 = vmatmul.mubr.bf16.gmra.mrb[0].mxu0 %v112
    %v417 = vpop.f32.mrb[0].mxu0
    %v418 = vadd.f32 0.0, %v417
    %v419 = vpop.f32.mrb[0].mxu0
    %v420 = vpop.f32.mrb[0].mxu0
    %v421 = vadd.f32 0.0, %v420
    %v422 = vpop.f32.mrb[0].mxu0
    %423 = vmatprep.mubr.bf16.mxu0 0
    %424 = vmatmul.mubr.bf16.gmra.mrb[0].mxu0 %v113
    %v425 = vpop.f32.mrb[0].mxu0
    %v426 = vadd.f32 0.0, %v425
    %v427 = vpop.f32.mrb[0].mxu0
    %v428 = vpop.f32.mrb[0].mxu0
    %v429 = vadd.f32 0.0, %v428
    %v430 = vpop.f32.mrb[0].mxu0
    %431 = vmatprep.mubr.bf16.mxu0 0
    %432 = vmatmul.mubr.bf16.gmra.mrb[0].mxu0 %v114
    %v433 = vpop.f32.mrb[0].mxu0
    %v434 = vadd.f32 0.0, %v433
    %v435 = vpop.f32.mrb[0].mxu0
    %v436 = vpop.f32.mrb[0].mxu0
    %v437 = vadd.f32 0.0, %v436
    %v438 = vpop.f32.mrb[0].mxu0
    %439 = vmatprep.mubr.bf16.mxu0 0
    %440 = vmatmul.mubr.bf16.gmra.mrb[0].mxu0 %v115
    %v441 = vpop.f32.mrb[0].mxu0
    %v442 = vadd.f32 0.0, %v441
    %v443 = vpop.f32.mrb[0].mxu0
    %v444 = vpop.f32.mrb[0].mxu0
    %v445 = vadd.f32 0.0, %v444
    %v446 = vpop.f32.mrb[0].mxu0
    %447 = vmatprep.mubr.bf16.mxu0 0
    %448 = vmatmul.mubr.bf16.gmra.mrb[0].mxu0 %v116
    %v449 = vpop.f32.mrb[0].mxu0
    %v450 = vadd.f32 0.0, %v449
    %v451 = vpop.f32.mrb[0].mxu0
    %v452 = vpop.f32.mrb[0].mxu0
    %v453 = vadd.f32 0.0, %v452
    %v454 = vpop.f32.mrb[0].mxu0
    %455 = vmatprep.mubr.bf16.mxu0 0
    %456 = vmatmul.mubr.bf16.gmra.mrb[0].mxu0 %v117
    %v457 = vpop.f32.mrb[0].mxu0
    %v458 = vadd.f32 0.0, %v457
    %v459 = vpop.f32.mrb[0].mxu0
    %v460 = vpop.f32.mrb[0].mxu0
    %v461 = vadd.f32 0.0, %v460
    %v462 = vpop.f32.mrb[0].mxu0
    %463 = vdwg.mxu0
    %v464 = vrot.slane %v291, 1
    %v465 = vrot.slane %v295, 1
    %v466 = vrot.slane %v301, 1
    %v467 = vrot.slane %v305, 1
    %v468 = vrot.slane %v311, 1
    %v469 = vrot.slane %v315, 1
    %v470 = vrot.slane %v321, 1
    %v471 = vrot.slane %v325, 1
    %v472 = vrot.slane %v331, 1
    %v473 = vrot.slane %v335, 1
    %v474 = vrot.slane %v341, 1
    %v475 = vrot.slane %v345, 1
    %v476 = vrot.slane %v351, 1
    %v477 = vrot.slane %v355, 1
    %v478 = vrot.slane %v361, 1
    %v479 = vrot.slane %v365, 1
    %v480 = vlaneseq
    %v481 = vshrl.u32 %v480, 7
    %vm482 = vcmp.lt.s32.totalorder %v481, 7
    %v483 = vsel %vm482, %v478, %v479
    %v484 = vsel %vm482, %v477, %v478
    %v485 = vsel %vm482, %v476, %v477
    %v486 = vsel %vm482, %v475, %v476
    %v487 = vsel %vm482, %v474, %v475
    %v488 = vsel %vm482, %v473, %v474
    %v489 = vsel %vm482, %v472, %v473
    %v490 = vsel %vm482, %v471, %v472
    %v491 = vsel %vm482, %v470, %v471
    %v492 = vsel %vm482, %v469, %v470
    %v493 = vsel %vm482, %v468, %v469
    %v494 = vsel %vm482, %v467, %v468
    %v495 = vsel %vm482, %v466, %v467
    %v496 = vsel %vm482, %v465, %v466
    %v497 = vsel %vm482, %v464, %v465
    %v498 = vsel %vm482, %v479, %v464
    %v499 = vadd.f32 %v289, %v497
    %v500 = vadd.f32 %v293, %v496
    %v501 = vadd.f32 %v299, %v495
    %v502 = vadd.f32 %v303, %v494
    %v503 = vadd.f32 %v309, %v493
    %v504 = vadd.f32 %v313, %v492
    %v505 = vadd.f32 %v319, %v491
    %v506 = vadd.f32 %v323, %v490
    %v507 = vadd.f32 %v329, %v489
    %v508 = vadd.f32 %v333, %v488
    %v509 = vadd.f32 %v339, %v487
    %v510 = vadd.f32 %v343, %v486
    %v511 = vadd.f32 %v349, %v485
    %v512 = vadd.f32 %v353, %v484
    %v513 = vadd.f32 %v359, %v483
    %v514 = vadd.f32 %v363, %v498
    %v515 = vrot.slane %v402, 2
    %v516 = vrot.slane %v405, 2
    %v517 = vrot.slane %v410, 2
    %v518 = vrot.slane %v413, 2
    %v519 = vrot.slane %v418, 2
    %v520 = vrot.slane %v421, 2
    %v521 = vrot.slane %v426, 2
    %v522 = vrot.slane %v429, 2
    %v523 = vrot.slane %v434, 2
    %v524 = vrot.slane %v437, 2
    %v525 = vrot.slane %v442, 2
    %v526 = vrot.slane %v445, 2
    %v527 = vrot.slane %v450, 2
    %v528 = vrot.slane %v453, 2
    %v529 = vrot.slane %v458, 2
    %v530 = vrot.slane %v461, 2
    %vm531 = vcmp.lt.s32.totalorder %v481, 6
    %v532 = vsel %vm531, %v529, %v530
    %v533 = vsel %vm531, %v528, %v529
    %v534 = vsel %vm531, %v527, %v528
    %v535 = vsel %vm531, %v526, %v527
    %v536 = vsel %vm531, %v525, %v526
    %v537 = vsel %vm531, %v524, %v525
    %v538 = vsel %vm531, %v523, %v524
    %v539 = vsel %vm531, %v522, %v523
    %v540 = vsel %vm531, %v521, %v522
    %v541 = vsel %vm531, %v520, %v521
    %v542 = vsel %vm531, %v519, %v520
    %v543 = vsel %vm531, %v518, %v519
    %v544 = vsel %vm531, %v517, %v518
    %v545 = vsel %vm531, %v516, %v517
    %v546 = vsel %vm531, %v515, %v516
    %v547 = vsel %vm531, %v530, %v515
    %v548 = vadd.f32 %v499, %v546
    %v549 = vadd.f32 %v500, %v545
    %v550 = vadd.f32 %v501, %v544
    %v551 = vadd.f32 %v502, %v543
    %v552 = vadd.f32 %v503, %v542
    %v553 = vadd.f32 %v504, %v541
    %v554 = vadd.f32 %v505, %v540
    %v555 = vadd.f32 %v506, %v539
    %v556 = vadd.f32 %v507, %v538
    %v557 = vadd.f32 %v508, %v537
    %v558 = vadd.f32 %v509, %v536
    %v559 = vadd.f32 %v510, %v535
    %v560 = vadd.f32 %v511, %v534
    %v561 = vadd.f32 %v512, %v533
    %v562 = vadd.f32 %v513, %v532
    %v563 = vadd.f32 %v514, %v547
    %v564 = vlaneseq
    %v565 = vshrl.u32 %v564, 7
    %v566 = vsub.s32 0, %v565
    %v567 = vrot.slane %v25, %v566
    %v568 = vadd.f32 %v548, %v567
    %v569 = vadd.f32 %v549, %v567
    %v570 = vadd.f32 %v550, %v567
    %v571 = vadd.f32 %v551, %v567
    %v572 = vadd.f32 %v552, %v567
    %v573 = vadd.f32 %v553, %v567
    %v574 = vadd.f32 %v554, %v567
    %v575 = vadd.f32 %v555, %v567
    %v576 = vadd.f32 %v556, %v567
    %v577 = vadd.f32 %v557, %v567
    %v578 = vadd.f32 %v558, %v567
    %v579 = vadd.f32 %v559, %v567
    %v580 = vadd.f32 %v560, %v567
    %v581 = vadd.f32 %v561, %v567
    %v582 = vadd.f32 %v562, %v567
    %v583 = vadd.f32 %v563, %v567
    %v584 = vmax.f32 %v568, 0.0
    %v585 = vmax.f32 %v569, 0.0
    %v586 = vmax.f32 %v570, 0.0
    %v587 = vmax.f32 %v571, 0.0
    %v588 = vmax.f32 %v572, 0.0
    %v589 = vmax.f32 %v573, 0.0
    %v590 = vmax.f32 %v574, 0.0
    %v591 = vmax.f32 %v575, 0.0
    %v592 = vmax.f32 %v576, 0.0
    %v593 = vmax.f32 %v577, 0.0
    %v594 = vmax.f32 %v578, 0.0
    %v595 = vmax.f32 %v579, 0.0
    %v596 = vmax.f32 %v580, 0.0
    %v597 = vmax.f32 %v581, 0.0
    %v598 = vmax.f32 %v582, 0.0
    %v599 = vmax.f32 %v583, 0.0
    %v600 = vsel %vm531, %v584, 0.0
    %v601 = vsel %vm531, %v585, 0.0
    %v602 = vsel %vm531, %v586, 0.0
    %v603 = vsel %vm531, %v587, 0.0
    %v604 = vsel %vm531, %v588, 0.0
    %v605 = vsel %vm531, %v589, 0.0
    %v606 = vsel %vm531, %v590, 0.0
    %v607 = vsel %vm531, %v591, 0.0
    %v608 = vsel %vm531, %v592, 0.0
    %v609 = vsel %vm531, %v593, 0.0
    %v610 = vsel %vm531, %v594, 0.0
    %v611 = vsel %vm531, %v595, 0.0
    %v612 = vsel %vm531, %v596, 0.0
    %v613 = vsel %vm531, %v597, 0.0
    %v614 = vsel %vm531, %v598, 0.0
    %v615 = vsel %vm531, %v599, 0.0
    %v616 = vrot.slane %v600, 4
    %v617 = vmax.f32 %v600, %v616
    %v618 = vrot.slane %v617, 2
    %v619 = vmax.f32 %v617, %v618
    %v620 = vrot.slane %v619, 1
    %v621 = vmax.f32 %v619, %v620
    %v622 = vrot.slane %v601, 4
    %v623 = vmax.f32 %v601, %v622
    %v624 = vrot.slane %v623, 2
    %v625 = vmax.f32 %v623, %v624
    %v626 = vrot.slane %v625, 1
    %v627 = vmax.f32 %v625, %v626
    %v628 = vrot.slane %v602, 4
    %v629 = vmax.f32 %v602, %v628
    %v630 = vrot.slane %v629, 2
    %v631 = vmax.f32 %v629, %v630
    %v632 = vrot.slane %v631, 1
    %v633 = vmax.f32 %v631, %v632
    %v634 = vrot.slane %v603, 4
    %v635 = vmax.f32 %v603, %v634
    %v636 = vrot.slane %v635, 2
    %v637 = vmax.f32 %v635, %v636
    %v638 = vrot.slane %v637, 1
    %v639 = vmax.f32 %v637, %v638
    %v640 = vrot.slane %v604, 4
    %v641 = vmax.f32 %v604, %v640
    %v642 = vrot.slane %v641, 2
    %v643 = vmax.f32 %v641, %v642
    %v644 = vrot.slane %v643, 1
    %v645 = vmax.f32 %v643, %v644
    %v646 = vrot.slane %v605, 4
    %v647 = vmax.f32 %v605, %v646
    %v648 = vrot.slane %v647, 2
    %v649 = vmax.f32 %v647, %v648
    %v650 = vrot.slane %v649, 1
    %v651 = vmax.f32 %v649, %v650
    %v652 = vrot.slane %v606, 4
    %v653 = vmax.f32 %v606, %v652
    %v654 = vrot.slane %v653, 2
    %v655 = vmax.f32 %v653, %v654
    %v656 = vrot.slane %v655, 1
    %v657 = vmax.f32 %v655, %v656
    %v658 = vrot.slane %v607, 4
    %v659 = vmax.f32 %v607, %v658
    %v660 = vrot.slane %v659, 2
    %v661 = vmax.f32 %v659, %v660
    %v662 = vrot.slane %v661, 1
    %v663 = vmax.f32 %v661, %v662
    %v664 = vrot.slane %v608, 4
    %v665 = vmax.f32 %v608, %v664
    %v666 = vrot.slane %v665, 2
    %v667 = vmax.f32 %v665, %v666
    %v668 = vrot.slane %v667, 1
    %v669 = vmax.f32 %v667, %v668
    %v670 = vrot.slane %v609, 4
    %v671 = vmax.f32 %v609, %v670
    %v672 = vrot.slane %v671, 2
    %v673 = vmax.f32 %v671, %v672
    %v674 = vrot.slane %v673, 1
    %v675 = vmax.f32 %v673, %v674
    %v676 = vrot.slane %v610, 4
    %v677 = vmax.f32 %v610, %v676
    %v678 = vrot.slane %v677, 2
    %v679 = vmax.f32 %v677, %v678
    %v680 = vrot.slane %v679, 1
    %v681 = vmax.f32 %v679, %v680
    %v682 = vrot.slane %v611, 4
    %v683 = vmax.f32 %v611, %v682
    %v684 = vrot.slane %v683, 2
    %v685 = vmax.f32 %v683, %v684
    %v686 = vrot.slane %v685, 1
    %v687 = vmax.f32 %v685, %v686
    %v688 = vrot.slane %v612, 4
    %v689 = vmax.f32 %v612, %v688
    %v690 = vrot.slane %v689, 2
    %v691 = vmax.f32 %v689, %v690
    %v692 = vrot.slane %v691, 1
    %v693 = vmax.f32 %v691, %v692
    %v694 = vrot.slane %v613, 4
    %v695 = vmax.f32 %v613, %v694
    %v696 = vrot.slane %v695, 2
    %v697 = vmax.f32 %v695, %v696
    %v698 = vrot.slane %v697, 1
    %v699 = vmax.f32 %v697, %v698
    %v700 = vrot.slane %v614, 4
    %v701 = vmax.f32 %v614, %v700
    %v702 = vrot.slane %v701, 2
    %v703 = vmax.f32 %v701, %v702
    %v704 = vrot.slane %v703, 1
    %v705 = vmax.f32 %v703, %v704
    %v706 = vrot.slane %v615, 4
    %v707 = vmax.f32 %v615, %v706
    %v708 = vrot.slane %v707, 2
    %v709 = vmax.f32 %v707, %v708
    %v710 = vrot.slane %v709, 1
    %v711 = vmax.f32 %v709, %v710
    %v712 = vpack.c.bf16 %v621, %v621
    %v713 = vpack.c.bf16 %v627, %v627
    %v714 = vpack.c.bf16 %v633, %v633
    %v715 = vpack.c.bf16 %v639, %v639
    %v716 = vpack.c.bf16 %v645, %v645
    %v717 = vpack.c.bf16 %v651, %v651
    %v718 = vpack.c.bf16 %v657, %v657
    %v719 = vpack.c.bf16 %v663, %v663
    %v720 = vpack.c.bf16 %v669, %v669
    %v721 = vpack.c.bf16 %v675, %v675
    %v722 = vpack.c.bf16 %v681, %v681
    %v723 = vpack.c.bf16 %v687, %v687
    %v724 = vpack.c.bf16 %v693, %v693
    %v725 = vpack.c.bf16 %v699, %v699
    %v726 = vpack.c.bf16 %v705, %v705
    %v727 = vpack.c.bf16 %v711, %v711
    %v728 = vld [vmem:[%s3] sm:$0xf]
    %v729 = vld [vmem:[%s3 + $0x4] sm:$0xf]
    %v730 = vld [vmem:[%s3 + $0x8] sm:$0xf]
    %v731 = vld [vmem:[%s3 + $0xc] sm:$0xf]
    %v732 = vld [vmem:[%s3 + $0x10] sm:$0xf]
    %v733 = vld [vmem:[%s3 + $0x14] sm:$0xf]
    %v734 = vld [vmem:[%s3 + $0x18] sm:$0xf]
    %v735 = vld [vmem:[%s3 + $0x1c] sm:$0xf]
    %v736 = vld [vmem:[%s3 + $0x20] sm:$0xf]
    %v737 = vld [vmem:[%s3 + $0x24] sm:$0xf]
    %v738 = vld [vmem:[%s3 + $0x28] sm:$0xf]
    %v739 = vld [vmem:[%s3 + $0x2c] sm:$0xf]
    %v740 = vld [vmem:[%s3 + $0x30] sm:$0xf]
    %v741 = vld [vmem:[%s3 + $0x34] sm:$0xf]
    %v742 = vld [vmem:[%s3 + $0x38] sm:$0xf]
    %v743 = vld [vmem:[%s3 + $0x3c] sm:$0xf]
    %v744 = vlaneseq
    %v745 = vshrl.u32 %v744, 7
    %v746 = vsub.s32 0, %v745
    %v747 = vrot.slane %v26, %v746
    %v764 = vunpack.c.l.b16 %v712
    %v765 = vunpack.c.l.b16 %v713
    %v766 = vunpack.c.l.b16 %v714
    %v767 = vunpack.c.l.b16 %v715
    %v768 = vunpack.c.l.b16 %v716
    %v769 = vunpack.c.l.b16 %v717
    %v770 = vunpack.c.l.b16 %v718
    %v771 = vunpack.c.l.b16 %v719
    %v772 = vunpack.c.l.b16 %v720
    %v773 = vunpack.c.l.b16 %v721
    %v774 = vunpack.c.l.b16 %v722
    %v775 = vunpack.c.l.b16 %v723
    %v776 = vunpack.c.l.b16 %v724
    %v777 = vunpack.c.l.b16 %v725
    %v778 = vunpack.c.l.b16 %v726
    %v779 = vunpack.c.l.b16 %v727
    %vm780 = vcmask 1041409
    %v781 = vsel %vm780, %v765, %v764
    %vm782 = vcmask 1042434
    %v783 = vsel %vm782, %v766, %v781
    %vm784 = vcmask 1043459
    %v785 = vsel %vm784, %v767, %v783
    %vm786 = vcmask 1044484
    %v787 = vsel %vm786, %v768, %v785
    %vm788 = vcmask 1045509
    %v789 = vsel %vm788, %v769, %v787
    %vm790 = vcmask 1046534
    %v791 = vsel %vm790, %v770, %v789
    %vm792 = vcmask 1047559
    %v793 = vsel %vm792, %v771, %v791
    %v794 = vsel %vm780, %v773, %v772
    %v795 = vsel %vm782, %v774, %v794
    %v796 = vsel %vm784, %v775, %v795
    %v797 = vsel %vm786, %v776, %v796
    %v798 = vsel %vm788, %v777, %v797
    %v799 = vsel %vm790, %v778, %v798
    %v800 = vsel %vm792, %v779, %v799
    %v801 = vpack.c.b16 %v800, %v793
    %v819 = vunpack.c.l.b16 %v728
    %v820 = vunpack.c.l.b16 %v729
    %v821 = vunpack.c.l.b16 %v730
    %v822 = vunpack.c.l.b16 %v731
    %v823 = vunpack.c.l.b16 %v732
    %v824 = vunpack.c.l.b16 %v733
    %v825 = vunpack.c.l.b16 %v734
    %v826 = vunpack.c.l.b16 %v735
    %v827 = vunpack.c.l.b16 %v736
    %v828 = vunpack.c.l.b16 %v737
    %v829 = vunpack.c.l.b16 %v738
    %v830 = vunpack.c.l.b16 %v739
    %v831 = vunpack.c.l.b16 %v740
    %v832 = vunpack.c.l.b16 %v741
    %v833 = vunpack.c.l.b16 %v742
    %v834 = vunpack.c.l.b16 %v743
    %v835 = vpack.c.b16 %v820, %v819
    %v836 = vpack.c.b16 %v822, %v821
    %v837 = vpack.c.b16 %v824, %v823
    %v838 = vpack.c.b16 %v826, %v825
    %v839 = vpack.c.b16 %v828, %v827
    %v840 = vpack.c.b16 %v830, %v829
    %v841 = vpack.c.b16 %v832, %v831
    %v842 = vpack.c.b16 %v834, %v833
    %851 = vmatprep.subr.bf16.mxu0 0
    %852 = vmatpush1.bf16.msra.mxu0 %v835
    %853 = vmatprep.subr.bf16.mxu0 0
    %854 = vmatpush1.bf16.msra.mxu0 %v836
    %855 = vmatprep.subr.bf16.mxu0 0
    %856 = vmatpush1.bf16.msra.mxu0 %v837
    %857 = vmatprep.subr.bf16.mxu0 0
    %858 = vmatpush1.bf16.msra.mxu0 %v838
    %859 = vmatprep.subr.bf16.mxu0 0
    %860 = vmatpush1.bf16.msra.mxu0 %v839
    %861 = vmatprep.subr.bf16.mxu0 0
    %862 = vmatpush1.bf16.msra.mxu0 %v840
    %863 = vmatprep.subr.bf16.mxu0 0
    %864 = vmatpush1.bf16.msra.mxu0 %v841
    %865 = vmatprep.subr.bf16.mxu0 0
    %866 = vmatpush1.bf16.msra.mxu0 %v842
    %867 = vmatprep.subr.bf16.mxu0 0
    %868 = vmatpush1.bf16.msra.mxu0 0
    %869 = vmatprep.subr.bf16.mxu0 0
    %870 = vmatpush1.bf16.msra.mxu0 0
    %871 = vmatprep.subr.bf16.mxu0 0
    %872 = vmatpush1.bf16.msra.mxu0 0
    %873 = vmatprep.subr.bf16.mxu0 0
    %874 = vmatpush1.bf16.msra.mxu0 0
    %875 = vmatprep.subr.bf16.mxu0 0
    %876 = vmatpush1.bf16.msra.mxu0 0
    %877 = vmatprep.subr.bf16.mxu0 0
    %878 = vmatpush1.bf16.msra.mxu0 0
    %879 = vmatprep.subr.bf16.mxu0 0
    %880 = vmatpush1.bf16.msra.mxu0 0
    %881 = vmatprep.subr.bf16.mxu0 0
    %882 = vmatpush1.bf16.msra.mxu0 0
    %883 = vmatprep.mubr.bf16.mxu0 0
    %884 = vmatmul.mubr.bf16.gmra.mrb[0].mxu0 %v801
    %v885 = vpop.f32.mrb[0].mxu0
    %v886 = vadd.f32 %v747, %v885
    %v887 = vpop.f32.mrb[0].mxu0
    %v888 = vpop.f32.mrb[0].mxu0
    %v889 = vadd.f32 %v747, %v888
    %v890 = vpop.f32.mrb[0].mxu0
    %891 = vdwg.mxu0
    %v892 = vmax.f32 %v886, 0.0
    %v893 = vmax.f32 %v889, 0.0
    %v894 = vld [vmem:[%s1] sm:$0xff]
    %v895 = vld [vmem:[%s1 + $0x8] sm:$0xff]
    %v896 = vlaneseq
    %v897 = vand.u32 %v896, 127
    %v898 = vadd.s32 %v897, 128
    %899 = vset.pattern.permute.xlu0 0
    %900 = vperm.xlu0 %899, %v894
    %v901 = vpop.permute.xlu0 %900
    %902 = vset.pattern.permute.xlu0 0
    %903 = vperm.xlu0 %902, %v895
    %v904 = vpop.permute.xlu0 %903
    %vm905 = vcmp.eq.s32.totalorder %v897, %v901
    %vm906 = vcmp.eq.s32.totalorder %v898, %v901
    %vm907 = vcmp.eq.s32.totalorder %v897, %v904
    %vm908 = vcmp.eq.s32.totalorder %v898, %v904
    %v909 = vsel %vm905, 1, 0
    %v910 = vsel %vm906, 1, 0
    %v911 = vsel %vm907, 1, 0
    %v912 = vsel %vm908, 1, 0
    %v913 = vcvt.s32.f32 %v909
    %v914 = vcvt.s32.f32 %v910
    %v915 = vcvt.s32.f32 %v911
    %v916 = vcvt.s32.f32 %v912
    %917 = vset.pattern.permute.xlu0 1
    %918 = vperm.xlu0 %917, %v894
    %v919 = vpop.permute.xlu0 %918
    %920 = vset.pattern.permute.xlu0 1
    %921 = vperm.xlu0 %920, %v895
    %v922 = vpop.permute.xlu0 %921
    %vm923 = vcmp.eq.s32.totalorder %v897, %v919
    %vm924 = vcmp.eq.s32.totalorder %v898, %v919
    %vm925 = vcmp.eq.s32.totalorder %v897, %v922
    %vm926 = vcmp.eq.s32.totalorder %v898, %v922
    %v927 = vsel %vm923, 1, 0
    %v928 = vsel %vm924, 1, 0
    %v929 = vsel %vm925, 1, 0
    %v930 = vsel %vm926, 1, 0
    %v931 = vcvt.s32.f32 %v927
    %v932 = vcvt.s32.f32 %v928
    %v933 = vcvt.s32.f32 %v929
    %v934 = vcvt.s32.f32 %v930
    %v935 = vadd.f32 %v913, %v931
    %v936 = vadd.f32 %v914, %v932
    %v937 = vadd.f32 %v915, %v933
    %v938 = vadd.f32 %v916, %v934
    %939 = vset.pattern.permute.xlu0 2
    %940 = vperm.xlu0 %939, %v894
    %v941 = vpop.permute.xlu0 %940
    %942 = vset.pattern.permute.xlu0 2
    %943 = vperm.xlu0 %942, %v895
    %v944 = vpop.permute.xlu0 %943
    %vm945 = vcmp.eq.s32.totalorder %v897, %v941
    %vm946 = vcmp.eq.s32.totalorder %v898, %v941
    %vm947 = vcmp.eq.s32.totalorder %v897, %v944
    %vm948 = vcmp.eq.s32.totalorder %v898, %v944
    %v949 = vsel %vm945, 1, 0
    %v950 = vsel %vm946, 1, 0
    %v951 = vsel %vm947, 1, 0
    %v952 = vsel %vm948, 1, 0
    %v953 = vcvt.s32.f32 %v949
    %v954 = vcvt.s32.f32 %v950
    %v955 = vcvt.s32.f32 %v951
    %v956 = vcvt.s32.f32 %v952
    %v957 = vadd.f32 %v935, %v953
    %v958 = vadd.f32 %v936, %v954
    %v959 = vadd.f32 %v937, %v955
    %v960 = vadd.f32 %v938, %v956
    %961 = vset.pattern.permute.xlu0 3
    %962 = vperm.xlu0 %961, %v894
    %v963 = vpop.permute.xlu0 %962
    %964 = vset.pattern.permute.xlu0 3
    %965 = vperm.xlu0 %964, %v895
    %v966 = vpop.permute.xlu0 %965
    %vm967 = vcmp.eq.s32.totalorder %v897, %v963
    %vm968 = vcmp.eq.s32.totalorder %v898, %v963
    %vm969 = vcmp.eq.s32.totalorder %v897, %v966
    %vm970 = vcmp.eq.s32.totalorder %v898, %v966
    %v971 = vsel %vm967, 1, 0
    %v972 = vsel %vm968, 1, 0
    %v973 = vsel %vm969, 1, 0
    %v974 = vsel %vm970, 1, 0
    %v975 = vcvt.s32.f32 %v971
    %v976 = vcvt.s32.f32 %v972
    %v977 = vcvt.s32.f32 %v973
    %v978 = vcvt.s32.f32 %v974
    %v979 = vadd.f32 %v957, %v975
    %v980 = vadd.f32 %v958, %v976
    %v981 = vadd.f32 %v959, %v977
    %v982 = vadd.f32 %v960, %v978
    %v983 = vpack.c.bf16 %v981, %v979
    %v984 = vpack.c.bf16 %v982, %v980
    %v985 = vld [vmem:[%s4] sm:$0xf]
    %v986 = vld [vmem:[%s4 + $0x4] sm:$0xf]
    %v987 = vld [vmem:[%s4 + $0x8] sm:$0xf]
    %v988 = vld [vmem:[%s4 + $0xc] sm:$0xf]
    %v989 = vld [vmem:[%s4 + $0x10] sm:$0xf]
    %v990 = vld [vmem:[%s4 + $0x14] sm:$0xf]
    %v991 = vld [vmem:[%s4 + $0x18] sm:$0xf]
    %v992 = vld [vmem:[%s4 + $0x1c] sm:$0xf]
    %v993 = vld [vmem:[%s4 + $0x20] sm:$0xf]
    %v994 = vld [vmem:[%s4 + $0x24] sm:$0xf]
    %v995 = vld [vmem:[%s4 + $0x28] sm:$0xf]
    %v996 = vld [vmem:[%s4 + $0x2c] sm:$0xf]
    %v997 = vld [vmem:[%s4 + $0x30] sm:$0xf]
    %v998 = vld [vmem:[%s4 + $0x34] sm:$0xf]
    %v999 = vld [vmem:[%s4 + $0x38] sm:$0xf]
    %v1000 = vld [vmem:[%s4 + $0x3c] sm:$0xf]
    %v1001 = vld [vmem:[%s4 + $0x40] sm:$0xf]
    %v1002 = vld [vmem:[%s4 + $0x44] sm:$0xf]
    %v1003 = vld [vmem:[%s4 + $0x48] sm:$0xf]
    %v1004 = vld [vmem:[%s4 + $0x4c] sm:$0xf]
    %v1005 = vld [vmem:[%s4 + $0x50] sm:$0xf]
    %v1006 = vld [vmem:[%s4 + $0x54] sm:$0xf]
    %v1007 = vld [vmem:[%s4 + $0x58] sm:$0xf]
    %v1008 = vld [vmem:[%s4 + $0x5c] sm:$0xf]
    %v1009 = vld [vmem:[%s4 + $0x60] sm:$0xf]
    %v1010 = vld [vmem:[%s4 + $0x64] sm:$0xf]
    %v1011 = vld [vmem:[%s4 + $0x68] sm:$0xf]
    %v1012 = vld [vmem:[%s4 + $0x6c] sm:$0xf]
    %v1013 = vld [vmem:[%s4 + $0x70] sm:$0xf]
    %v1014 = vld [vmem:[%s4 + $0x74] sm:$0xf]
    %v1015 = vld [vmem:[%s4 + $0x78] sm:$0xf]
    %v1016 = vld [vmem:[%s4 + $0x7c] sm:$0xf]
    %v1017 = vlaneseq
    %v1018 = vshrl.u32 %v1017, 7
    %v1019 = vsub.s32 0, %v1018
    %v1020 = vrot.slane %v27, %v1019
    %v1053 = vunpack.c.l.b16 %v985
    %v1054 = vunpack.c.l.b16 %v986
    %v1055 = vunpack.c.l.b16 %v987
    %v1056 = vunpack.c.l.b16 %v988
    %v1057 = vunpack.c.l.b16 %v989
    %v1058 = vunpack.c.l.b16 %v990
    %v1059 = vunpack.c.l.b16 %v991
    %v1060 = vunpack.c.l.b16 %v992
    %v1061 = vunpack.c.l.b16 %v993
    %v1062 = vunpack.c.l.b16 %v994
    %v1063 = vunpack.c.l.b16 %v995
    %v1064 = vunpack.c.l.b16 %v996
    %v1065 = vunpack.c.l.b16 %v997
    %v1066 = vunpack.c.l.b16 %v998
    %v1067 = vunpack.c.l.b16 %v999
    %v1068 = vunpack.c.l.b16 %v1000
    %v1069 = vunpack.c.l.b16 %v1001
    %v1070 = vunpack.c.l.b16 %v1002
    %v1071 = vunpack.c.l.b16 %v1003
    %v1072 = vunpack.c.l.b16 %v1004
    %v1073 = vunpack.c.l.b16 %v1005
    %v1074 = vunpack.c.l.b16 %v1006
    %v1075 = vunpack.c.l.b16 %v1007
    %v1076 = vunpack.c.l.b16 %v1008
    %v1077 = vunpack.c.l.b16 %v1009
    %v1078 = vunpack.c.l.b16 %v1010
    %v1079 = vunpack.c.l.b16 %v1011
    %v1080 = vunpack.c.l.b16 %v1012
    %v1081 = vunpack.c.l.b16 %v1013
    %v1082 = vunpack.c.l.b16 %v1014
    %v1083 = vunpack.c.l.b16 %v1015
    %v1084 = vunpack.c.l.b16 %v1016
    %v1085 = vpack.c.b16 %v1054, %v1053
    %v1086 = vpack.c.b16 %v1056, %v1055
    %v1087 = vpack.c.b16 %v1058, %v1057
    %v1088 = vpack.c.b16 %v1060, %v1059
    %v1089 = vpack.c.b16 %v1062, %v1061
    %v1090 = vpack.c.b16 %v1064, %v1063
    %v1091 = vpack.c.b16 %v1066, %v1065
    %v1092 = vpack.c.b16 %v1068, %v1067
    %v1093 = vpack.c.b16 %v1070, %v1069
    %v1094 = vpack.c.b16 %v1072, %v1071
    %v1095 = vpack.c.b16 %v1074, %v1073
    %v1096 = vpack.c.b16 %v1076, %v1075
    %v1097 = vpack.c.b16 %v1078, %v1077
    %v1098 = vpack.c.b16 %v1080, %v1079
    %v1099 = vpack.c.b16 %v1082, %v1081
    %v1100 = vpack.c.b16 %v1084, %v1083
    %1117 = vmatprep.subr.bf16.mxu0 0
    %1118 = vmatpush1.bf16.msra.mxu0 %v1085
    %1119 = vmatprep.subr.bf16.mxu0 0
    %1120 = vmatpush1.bf16.msra.mxu0 %v1086
    %1121 = vmatprep.subr.bf16.mxu0 0
    %1122 = vmatpush1.bf16.msra.mxu0 %v1087
    %1123 = vmatprep.subr.bf16.mxu0 0
    %1124 = vmatpush1.bf16.msra.mxu0 %v1088
    %1125 = vmatprep.subr.bf16.mxu0 0
    %1126 = vmatpush1.bf16.msra.mxu0 %v1089
    %1127 = vmatprep.subr.bf16.mxu0 0
    %1128 = vmatpush1.bf16.msra.mxu0 %v1090
    %1129 = vmatprep.subr.bf16.mxu0 0
    %1130 = vmatpush1.bf16.msra.mxu0 %v1091
    %1131 = vmatprep.subr.bf16.mxu0 0
    %1132 = vmatpush1.bf16.msra.mxu0 %v1092
    %1133 = vmatprep.subr.bf16.mxu0 0
    %1134 = vmatpush1.bf16.msra.mxu0 %v1093
    %1135 = vmatprep.subr.bf16.mxu0 0
    %1136 = vmatpush1.bf16.msra.mxu0 %v1094
    %1137 = vmatprep.subr.bf16.mxu0 0
    %1138 = vmatpush1.bf16.msra.mxu0 %v1095
    %1139 = vmatprep.subr.bf16.mxu0 0
    %1140 = vmatpush1.bf16.msra.mxu0 %v1096
    %1141 = vmatprep.subr.bf16.mxu0 0
    %1142 = vmatpush1.bf16.msra.mxu0 %v1097
    %1143 = vmatprep.subr.bf16.mxu0 0
    %1144 = vmatpush1.bf16.msra.mxu0 %v1098
    %1145 = vmatprep.subr.bf16.mxu0 0
    %1146 = vmatpush1.bf16.msra.mxu0 %v1099
    %1147 = vmatprep.subr.bf16.mxu0 0
    %1148 = vmatpush1.bf16.msra.mxu0 %v1100
    %1149 = vmatprep.mubr.bf16.mxu0 %v984
    %1150 = vmatmul.mubr.bf16.gmra.mrb[0].mxu0 %v983
    %v1151 = vpop.f32.mrb[0].mxu0
    %v1152 = vadd.f32 %v1020, %v1151
    %v1153 = vpop.f32.mrb[0].mxu0
    %v1154 = vpop.f32.mrb[0].mxu0
    %v1155 = vadd.f32 %v1020, %v1154
    %v1156 = vpop.f32.mrb[0].mxu0
    %1157 = vdwg.mxu0
    %v1158 = vmax.f32 %v1152, 0.0
    %v1159 = vmax.f32 %v1155, 0.0
    %v1160 = vadd.f32 %v892, %v1158
    %v1161 = vadd.f32 %v893, %v1159
    %1162 = vadd.xlane.f32.xlu0 %v1160
    %v1163 = vpop.xlane.xlu0 %1162
    %1164 = vadd.xlane.f32.xlu0 %v1161
    %v1165 = vpop.xlane.xlu0 %1164
    %v1166 = vrcp.pop 128.0
    %v1167 = vmul.f32 %v1163, %v1166
    %v1168 = vmul.f32 %v1165, %v1166
    %v1169 = vsub.f32 %v1160, %v1167
    %v1170 = vsub.f32 %v1161, %v1168
    %v1171 = vmul.f32 %v1169, %v1169
    %v1172 = vmul.f32 %v1170, %v1170
    %1173 = vadd.xlane.f32.xlu0 %v1171
    %v1174 = vpop.xlane.xlu0 %1173
    %1175 = vadd.xlane.f32.xlu0 %v1172
    %v1176 = vpop.xlane.xlu0 %1175
    %v1177 = vmul.f32 %v1174, %v1166
    %v1178 = vmul.f32 %v1176, %v1166
    %v1179 = vadd.f32 %v1177, 1e-05
    %v1180 = vadd.f32 %v1178, 1e-05
    %v1181 = vrsqrt.pop %v1179
    %v1182 = vrsqrt.pop %v1180
    %v1183 = vmul.f32 %v1169, %v1181
    %v1184 = vmul.f32 %v1170, %v1182
    %v1185 = vlaneseq
    %v1186 = vshrl.u32 %v1185, 7
    %v1187 = vsub.s32 0, %v1186
    %v1188 = vrot.slane %v28, %v1187
    %v1189 = vmul.f32 %v1183, %v1188
    %v1190 = vmul.f32 %v1184, %v1188
    %v1191 = vlaneseq
    %v1192 = vshrl.u32 %v1191, 7
    %v1193 = vsub.s32 0, %v1192
    %v1194 = vrot.slane %v29, %v1193
    %v1195 = vadd.f32 %v1189, %v1194
    %v1196 = vadd.f32 %v1190, %v1194
    %1197 = vst [vmem:[#allocation2] sm:$0xff] %v1195
    %1198 = vst [vmem:[#allocation2 + $0x8] sm:$0xff] %v1196
    // Predicated region
    $region26: #{node_embedding_forward.1} parent=1 // pred_check
      _
    $region27: #{node_embedding_forward.1} parent=1 // pred_check_branch
      %1200 = sbr.rel (0) target = $region29
    $region28: #{node_embedding_forward.1} parent=1 // pred_region
      %s1202 = ssub.s32 256, 256
      %1203 = vsyncadd [#allocation3], %s1202
      %s1204 = sshll.u32 [#allocation2], 4
      %s1205 = int_to_ptr.vmem [resolvable:$true] %s1204
      %1210 = dma.vmem_to_hbm [thread:$0]  %s1205, 256, %s6, [#allocation3], 128, 128, 8
    $region29: #{node_embedding_forward.1} parent=1 // pred_fallthru
      _
    // Predicated region
    $region30: #{node_embedding_forward.1} parent=1 // pred_check
      _
    $region31: #{node_embedding_forward.1} parent=1 // pred_check_branch
      %1212 = sbr.rel (0) target = $region33
    $region32: #{node_embedding_forward.1} parent=1 // pred_region
      %1213 = dma.done [#allocation3], 256
    $region33: #{node_embedding_forward.1} parent=1 // pred_fallthru
      _
    %1214 = vsyncpa [#allocation3], 1

</llo_original>
